<compile_context>
chip_gen: v7x
topology: tpu7x:2x2x1
jax: 0.10.0
libtpu: 0.0.40
codegen_flags: <defaults>
</compile_context>

<pallas_src>
import math

import jax
import jax.numpy as jnp
from jax.experimental import pallas as pl
from jax.experimental.pallas import tpu as pltpu


# --------------------------------------------------------------------------
# Kernel: one (batch-block, head) grid step
# --------------------------------------------------------------------------
def _mha_head_step_kernel(x_ref, wq_ref, bq_ref, wv_ref, bv_ref, wo_ref, bo_ref,
                          o_ref):
    h = pl.program_id(1)
    tb, s, w = x_ref.shape            # (batch_block, S, W)
    hs = wq_ref.shape[-1]             # head_size

    # Flatten rows for the lane-dense 2-D projection matmuls.
    x2 = x_ref[...].reshape(tb * s, w).astype(jnp.bfloat16)      # (rows, W)

    # Per-head Q/V projections (weights already bf16; slices come from BlockSpec
    # DMA, no in-kernel lane slicing).  f32 accumulation on the MXU.
    q2 = jnp.dot(x2, wq_ref[...], preferred_element_type=jnp.float32) + bq_ref[...]
    v2 = jnp.dot(x2, wv_ref[...], preferred_element_type=jnp.float32) + bv_ref[...]

    q3 = q2.reshape(tb, s, hs).astype(jnp.bfloat16)
    v3 = v2.reshape(tb, s, hs).astype(jnp.bfloat16)

    # Reference quirk: K = self.query(x)  ->  scores = Q @ Q^T.
    scores = jnp.einsum('bqd,bkd->bqk', q3, q3,
                        preferred_element_type=jnp.float32)
    scores = scores * (1.0 / math.sqrt(hs))

    # Softmax in f32 on the VPU; the divide goes to the EUP reciprocal slot.
    # (approx=True -> rows sum to ~1 within EUP precision; fine for inference.)
    scores = scores - jnp.max(scores, axis=-1, keepdims=True)
    p = jnp.exp(scores)
    p = p * pl.reciprocal(jnp.sum(p, axis=-1, keepdims=True), approx=True)

    pv = jnp.einsum('bqk,bkd->bqd', p.astype(jnp.bfloat16), v3,
                    preferred_element_type=jnp.float32)           # (tb, S, Hs)

    # Fused output projection:  concat_h(head_h) @ Wo  ==  sum_h head_h @ Wo[h].
    # Lane-dense N = W matmul; f32 accumulation into the resident output block.
    contrib = jnp.dot(pv.reshape(tb * s, hs).astype(jnp.bfloat16), wo_ref[...],
                      preferred_element_type=jnp.float32).reshape(tb, s, w)

    @pl.when(h == 0)
    def _init():
        # Output block stays resident in VMEM across the head (reduction) axis;
        # seed it with the W_o bias once per batch block.
        o_ref[...] = jnp.broadcast_to(bo_ref[...], o_ref.shape).astype(o_ref.dtype)

    o_ref[...] += contrib.astype(o_ref.dtype)


# --------------------------------------------------------------------------
# Wrapper helpers
# --------------------------------------------------------------------------
def _pick_batch_block(batch, seq, target_rows=512):
    """Largest batch_block with batch_block*seq <= target_rows, keeping >= 2
    grid steps on the parallel batch axis whenever possible (v7x has 2 TCs)."""
    divisors = [d for d in range(1, batch + 1) if batch % d == 0]
    pref = [d for d in divisors if batch // d >= 2] or divisors
    fitting = [d for d in pref if d * seq <= target_rows]
    return max(fitting) if fitting else min(pref)


def _derive_vmem_limit(batch_block, seq, width, head_size):
    """Rough per-step VMEM footprint (double-buffered blocks + intermediates),
    with headroom; replaces the previous hard-coded 32 MiB cap."""
    rows = batch_block * seq
    f32, bf16 = 4, 2
    blocks = 2 * 2 * rows * width * f32                                  # x + out
    blocks += 2 * (2 * width * head_size + head_size * width) * bf16     # wq, wv, wo
    interm = rows * (3 * head_size + width) * f32 + 2 * batch_block * seq * seq * f32
    est = blocks + interm + (1 << 20)
    return int(min(64 * 2 ** 20, max(16 * 2 ** 20, 4 * est)))


def multi_head_attention(x, params, mask=None, *, n_heads, batch_block=None):
    """x: (B, S, W) float32 -> (B, S, W) float32."""
    assert mask is None, "mask path not implemented"   # TODO(synk): masked_fill path
    B, S, W = x.shape
    assert W % n_heads == 0
    head_size = W // n_heads

    if batch_block is None:
        batch_block = _pick_batch_block(B, S)
    assert B % batch_block == 0

    wq, bq = params["wq"], params["bq"]   # (H, W, Hs) bf16, (H, 1, Hs) f32
    wv, bv = params["wv"], params["bv"]   # (H, W, Hs) bf16, (H, 1, Hs) f32
    wo, bo = params["wo"], params["bo"]   # (H, Hs, W) bf16, (1, 1, W) f32

    grid = (B // batch_block, n_heads)

    out = pl.pallas_call(
        _mha_head_step_kernel,
        out_shape=jax.ShapeDtypeStruct((B, S, W), x.dtype),
        grid_spec=pltpu.PrefetchScalarGridSpec(
            num_scalar_prefetch=0,
            grid=grid,
            in_specs=[
                pl.BlockSpec((batch_block, S, W), lambda i, h: (i, 0, 0)),    # x
                pl.BlockSpec((None, W, head_size), lambda i, h: (h, 0, 0)),   # Wq[h]
                pl.BlockSpec((None, 1, head_size), lambda i, h: (h, 0, 0)),   # bq[h]
                pl.BlockSpec((None, W, head_size), lambda i, h: (h, 0, 0)),   # Wv[h]
                pl.BlockSpec((None, 1, head_size), lambda i, h: (h, 0, 0)),   # bv[h]
                pl.BlockSpec((None, head_size, W), lambda i, h: (h, 0, 0)),   # Wo[h]
                pl.BlockSpec((1, 1, W), lambda i, h: (0, 0, 0)),              # bo
            ],
            out_specs=pl.BlockSpec((batch_block, S, W), lambda i, h: (i, 0, 0)),
        ),
        compiler_params=pltpu.CompilerParams(
            dimension_semantics=("parallel", "arbitrary"),
            vmem_limit_bytes=_derive_vmem_limit(batch_block, S, W, head_size)),
    )(x, wq, bq, wv, bv, wo, bo)

    return out


# --------------------------------------------------------------------------
# Deterministic parameter init (PyTorch nn.Linear semantics, head-major packing)
# --------------------------------------------------------------------------
def init_params(key, width, n_heads):
    head_size = width // n_heads
    keys = jax.random.split(key, 6)
    scale = 0.02

    # nn.Linear(width, head_size).weight: (head_size, width); y = x @ W.T + b.
    wq = jax.random.normal(keys[0], (n_heads, head_size, width), jnp.float32) * scale
    bq = jax.random.normal(keys[1], (n_heads, head_size), jnp.float32) * scale
    wv = jax.random.normal(keys[2], (n_heads, head_size, width), jnp.float32) * scale
    bv = jax.random.normal(keys[3], (n_heads, head_size), jnp.float32) * scale
    # nn.Linear(width, width): weight (W_out, W_in).
    wo = jax.random.normal(keys[4], (width, width), jnp.float32) * scale
    bo = jax.random.normal(keys[5], (width,), jnp.float32) * scale

    return {
        # Per-head packing, weights stored bf16 (halves DMA + VMEM), biases f32.
        "wq": jnp.transpose(wq, (0, 2, 1)).astype(jnp.bfloat16),            # (H, W, Hs)
        "bq": bq[:, None, :],                                               # (H, 1, Hs)
        "wv": jnp.transpose(wv, (0, 2, 1)).astype(jnp.bfloat16),            # (H, W, Hs)
        "bv": bv[:, None, :],                                               # (H, 1, Hs)
        # Wo.T split along its input axis: rows h*Hs:(h+1)*Hs -> head h.
        "wo": wo.T.reshape(n_heads, head_size, width).astype(jnp.bfloat16), # (H, Hs, W)
        "bo": bo[None, None, :],                                            # (1, 1, W)
    }


# --------------------------------------------------------------------------
# Pure-JAX f32 reference (mirrors the PyTorch forward) for a sanity check
# --------------------------------------------------------------------------
def reference(x, params):
    wq = params["wq"].astype(jnp.float32)
    wv = params["wv"].astype(jnp.float32)
    wo = params["wo"].astype(jnp.float32)
    H, _, Hs = wq.shape
    outs = []
    for h in range(H):
        q = x @ wq[h] + params["bq"][h]
        v = x @ wv[h] + params["bv"][h]
        a = (q @ jnp.swapaxes(q, -2, -1)) / math.sqrt(Hs)   # K == Q reference quirk
        a = jax.nn.softmax(a, axis=-1)
        outs.append(a @ v)
    cat = jnp.concatenate(outs, axis=-1)                    # (B, S, W)
    wo_full = wo.reshape(H * Hs, -1)                        # (W, W)
    return cat @ wo_full + params["bo"][0]


if __name__ == "__main__":
    B, S, W, H = 4, 8, 32, 4

    key = jax.random.PRNGKey(0)
    kx, kp = jax.random.split(key)
    x = jax.random.normal(kx, (B, S, W), jnp.float32)
    params = init_params(kp, W, H)

    out = multi_head_attention(x, params, mask=None, n_heads=H)
    out = jax.block_until_ready(out)

    ref = reference(x, params)
    assert out.shape == (B, S, W)
    # bf16 MXU operands + approximate EUP reciprocal -> loosened tolerance.
    err = float(jnp.max(jnp.abs(out - ref)))
    assert jnp.allclose(out, ref, atol=1e-2, rtol=5e-2), f"max abs err {err}"

    print("KERNEL_OK")
</pallas_src>

<mosaic_0001>
module attributes {stable_mosaic.version = 11 : i64} {
  func.func @_mha_head_step_kernel(%arg0: i32, %arg1: i32, %arg2: memref<2x8x32xf32, #tpu.memory_space<vmem>>, %arg3: memref<1x32x8xbf16, #tpu.memory_space<vmem>>, %arg4: memref<1x1x8xf32, #tpu.memory_space<vmem>>, %arg5: memref<1x32x8xbf16, #tpu.memory_space<vmem>>, %arg6: memref<1x1x8xf32, #tpu.memory_space<vmem>>, %arg7: memref<1x8x32xbf16, #tpu.memory_space<vmem>>, %arg8: memref<1x1x32xf32, #tpu.memory_space<vmem>>, %arg9: memref<2x8x32xf32, #tpu.memory_space<vmem>>) attributes {dimension_semantics = [#tpu.dimension_semantics<parallel>, #tpu.dimension_semantics<arbitrary>], iteration_bounds = array<i64: 2, 4>, scalar_prefetch = 0 : i64, scratch_operands = 0 : i64, tpu.core_type = #tpu.core_type<tc>, window_params = [{transform_indices = @transform_0, window_bounds = array<i64: 2, 8, 32>}, {transform_indices = @transform_1, window_bounds = array<i64: 1, 32, 8>}, {transform_indices = @transform_2, window_bounds = array<i64: 1, 1, 8>}, {transform_indices = @transform_3, window_bounds = array<i64: 1, 32, 8>}, {transform_indices = @transform_4, window_bounds = array<i64: 1, 1, 8>}, {transform_indices = @transform_5, window_bounds = array<i64: 1, 8, 32>}, {pipeline_mode = #tpu.pipeline_mode<synchronous>, transform_indices = @transform_6, window_bounds = array<i64: 1, 1, 32>}, {transform_indices = @transform_7, window_bounds = array<i64: 2, 8, 32>}]} {
    %c0 = arith.constant 0 : index
    %c0_0 = arith.constant 0 : index
    %c0_1 = arith.constant 0 : index
    %0 = vector.load %arg2[%c0, %c0_0, %c0_1] : memref<2x8x32xf32, #tpu.memory_space<vmem>>, vector<2x8x32xf32>
    %1 = vector.shape_cast %0 : vector<2x8x32xf32> to vector<16x32xf32>
    %2 = arith.truncf %1 : vector<16x32xf32> to vector<16x32xbf16>
    %c0_2 = arith.constant 0 : index
    %c0_3 = arith.constant 0 : index
    %c0_4 = arith.constant 0 : index
    %3 = vector.load %arg3[%c0_2, %c0_3, %c0_4] : memref<1x32x8xbf16, #tpu.memory_space<vmem>>, vector<1x32x8xbf16>
    %4 = vector.shape_cast %3 : vector<1x32x8xbf16> to vector<32x8xbf16>
    %cst = arith.constant dense<0.000000e+00> : vector<16x8xf32>
    %5 = tpu.matmul %2, %4, %cst {dimension_numbers = #tpu.dot_dimension_numbers<[1], [0], [0], [1], [0, 0, 1, 1], [], []>} : vector<16x32xbf16>, vector<32x8xbf16>, vector<16x8xf32> -> vector<16x8xf32>
    %c0_5 = arith.constant 0 : index
    %c0_6 = arith.constant 0 : index
    %c0_7 = arith.constant 0 : index
    %6 = vector.load %arg4[%c0_5, %c0_6, %c0_7] : memref<1x1x8xf32, #tpu.memory_space<vmem>>, vector<1x1x8xf32>
    %7 = vector.shape_cast %6 : vector<1x1x8xf32> to vector<1x8xf32>
    %8 = vector.broadcast %7 : vector<1x8xf32> to vector<16x8xf32>
    %9 = arith.addf %5, %8 : vector<16x8xf32>
    %c0_8 = arith.constant 0 : index
    %c0_9 = arith.constant 0 : index
    %c0_10 = arith.constant 0 : index
    %10 = vector.load %arg5[%c0_8, %c0_9, %c0_10] : memref<1x32x8xbf16, #tpu.memory_space<vmem>>, vector<1x32x8xbf16>
    %11 = vector.shape_cast %10 : vector<1x32x8xbf16> to vector<32x8xbf16>
    %cst_11 = arith.constant dense<0.000000e+00> : vector<16x8xf32>
    %12 = tpu.matmul %2, %11, %cst_11 {dimension_numbers = #tpu.dot_dimension_numbers<[1], [0], [0], [1], [0, 0, 1, 1], [], []>} : vector<16x32xbf16>, vector<32x8xbf16>, vector<16x8xf32> -> vector<16x8xf32>
    %c0_12 = arith.constant 0 : index
    %c0_13 = arith.constant 0 : index
    %c0_14 = arith.constant 0 : index
    %13 = vector.load %arg6[%c0_12, %c0_13, %c0_14] : memref<1x1x8xf32, #tpu.memory_space<vmem>>, vector<1x1x8xf32>
    %14 = vector.shape_cast %13 : vector<1x1x8xf32> to vector<1x8xf32>
    %15 = vector.broadcast %14 : vector<1x8xf32> to vector<16x8xf32>
    %16 = arith.addf %12, %15 : vector<16x8xf32>
    %17 = vector.shape_cast %9 : vector<16x8xf32> to vector<2x8x8xf32>
    %18 = arith.truncf %17 : vector<2x8x8xf32> to vector<2x8x8xbf16>
    %19 = vector.shape_cast %16 : vector<16x8xf32> to vector<2x8x8xf32>
    %20 = arith.truncf %19 : vector<2x8x8xf32> to vector<2x8x8xbf16>
    "tpu.trace_start"() <{level = 10 : i32, message = "bqd,bkd->bqk"}> : () -> ()
    %cst_15 = arith.constant dense<0.000000e+00> : vector<2x8x8xf32>
    %21 = tpu.matmul %18, %18, %cst_15 {dimension_numbers = #tpu.dot_dimension_numbers<[2], [2], [1], [1], [0, 0, 0, 1, 1, 1], [0], [0]>} : vector<2x8x8xbf16>, vector<2x8x8xbf16>, vector<2x8x8xf32> -> vector<2x8x8xf32>
    "tpu.trace_stop"() : () -> ()
    %cst_16 = arith.constant 0.353553385 : f32
    %22 = vector.broadcast %cst_16 : f32 to vector<2x8x8xf32>
    %23 = arith.mulf %21, %22 : vector<2x8x8xf32>
    %cst_17 = arith.constant dense<0xFF800000> : vector<2x8xf32>
    %24 = vector.multi_reduction <maximumf>, %23, %cst_17 [2] : vector<2x8x8xf32> to vector<2x8xf32>
    %25 = vector.shape_cast %24 : vector<2x8xf32> to vector<2x8x1xf32>
    %26 = vector.broadcast %25 : vector<2x8x1xf32> to vector<2x8x8xf32>
    %27 = arith.subf %23, %26 : vector<2x8x8xf32>
    %28 = math.exp %27 : vector<2x8x8xf32>
    %cst_18 = arith.constant dense<0.000000e+00> : vector<2x8xf32>
    %29 = vector.multi_reduction <add>, %28, %cst_18 [2] : vector<2x8x8xf32> to vector<2x8xf32>
    %30 = vector.shape_cast %29 : vector<2x8xf32> to vector<2x8x1xf32>
    %31 = tpu.reciprocal %30 {approx = true} : vector<2x8x1xf32> -> vector<2x8x1xf32>
    %32 = vector.broadcast %31 : vector<2x8x1xf32> to vector<2x8x8xf32>
    %33 = arith.mulf %28, %32 : vector<2x8x8xf32>
    %34 = arith.truncf %33 : vector<2x8x8xf32> to vector<2x8x8xbf16>
    "tpu.trace_start"() <{level = 10 : i32, message = "bqk,bkd->bqd"}> : () -> ()
    %cst_19 = arith.constant dense<0.000000e+00> : vector<2x8x8xf32>
    %35 = tpu.matmul %34, %20, %cst_19 {dimension_numbers = #tpu.dot_dimension_numbers<[2], [1], [1], [2], [0, 0, 0, 1, 1, 2], [0], [0]>} : vector<2x8x8xbf16>, vector<2x8x8xbf16>, vector<2x8x8xf32> -> vector<2x8x8xf32>
    "tpu.trace_stop"() : () -> ()
    %36 = vector.shape_cast %35 : vector<2x8x8xf32> to vector<16x8xf32>
    %37 = arith.truncf %36 : vector<16x8xf32> to vector<16x8xbf16>
    %c0_20 = arith.constant 0 : index
    %c0_21 = arith.constant 0 : index
    %c0_22 = arith.constant 0 : index
    %38 = vector.load %arg7[%c0_20, %c0_21, %c0_22] : memref<1x8x32xbf16, #tpu.memory_space<vmem>>, vector<1x8x32xbf16>
    %39 = vector.shape_cast %38 : vector<1x8x32xbf16> to vector<8x32xbf16>
    %cst_23 = arith.constant dense<0.000000e+00> : vector<16x32xf32>
    %40 = tpu.matmul %37, %39, %cst_23 {dimension_numbers = #tpu.dot_dimension_numbers<[1], [0], [0], [1], [0, 0, 1, 1], [], []>} : vector<16x8xbf16>, vector<8x32xbf16>, vector<16x32xf32> -> vector<16x32xf32>
    %41 = vector.shape_cast %40 : vector<16x32xf32> to vector<2x8x32xf32>
    %c0_i32 = arith.constant 0 : i32
    %42 = arith.cmpi eq, %arg1, %c0_i32 : i32
    %43 = arith.extui %42 : i1 to i32
    %c0_i32_24 = arith.constant 0 : i32
    %44 = arith.cmpi ne, %43, %c0_i32_24 : i32
    scf.if %44 {
      %c0_31 = arith.constant 0 : index
      %c0_32 = arith.constant 0 : index
      %c0_33 = arith.constant 0 : index
      %48 = vector.load %arg8[%c0_31, %c0_32, %c0_33] : memref<1x1x32xf32, #tpu.memory_space<vmem>>, vector<1x1x32xf32>
      %49 = vector.shape_cast %48 : vector<1x1x32xf32> to vector<1x1x32xf32>
      %50 = vector.broadcast %49 : vector<1x1x32xf32> to vector<2x8x32xf32>
      %c0_34 = arith.constant 0 : index
      %c0_35 = arith.constant 0 : index
      %c0_36 = arith.constant 0 : index
      %51 = vector.load %arg9[%c0_34, %c0_35, %c0_36] : memref<2x8x32xf32, #tpu.memory_space<vmem>>, vector<2x8x32xf32>
      tpu.vector_store %arg9[%c0_34, %c0_35, %c0_36], %50 {strides = array<i32>} : memref<2x8x32xf32, #tpu.memory_space<vmem>>, vector<2x8x32xf32>,
    } else {
    }
    %c0_25 = arith.constant 0 : index
    %c0_26 = arith.constant 0 : index
    %c0_27 = arith.constant 0 : index
    %45 = vector.load %arg9[%c0_25, %c0_26, %c0_27] : memref<2x8x32xf32, #tpu.memory_space<vmem>>, vector<2x8x32xf32>
    %46 = arith.addf %45, %41 : vector<2x8x32xf32>
    %c0_28 = arith.constant 0 : index
    %c0_29 = arith.constant 0 : index
    %c0_30 = arith.constant 0 : index
    %47 = vector.load %arg9[%c0_28, %c0_29, %c0_30] : memref<2x8x32xf32, #tpu.memory_space<vmem>>, vector<2x8x32xf32>
    tpu.vector_store %arg9[%c0_28, %c0_29, %c0_30], %46 {strides = array<i32>} : memref<2x8x32xf32, #tpu.memory_space<vmem>>, vector<2x8x32xf32>,
    return
  }
  func.func @transform_0(%arg0: i32, %arg1: i32) -> (i32, i32, i32) {
    %c0_i32 = arith.constant 0 : i32
    %c0_i32_0 = arith.constant 0 : i32
    %c0_i32_1 = arith.constant 0 : i32
    return %arg0, %c0_i32, %c0_i32_0 : i32, i32, i32
  }
  func.func @transform_1(%arg0: i32, %arg1: i32) -> (i32, i32, i32) {
    %c0_i32 = arith.constant 0 : i32
    %c0_i32_0 = arith.constant 0 : i32
    %c0_i32_1 = arith.constant 0 : i32
    return %arg1, %c0_i32, %c0_i32_0 : i32, i32, i32
  }
  func.func @transform_2(%arg0: i32, %arg1: i32) -> (i32, i32, i32) {
    %c0_i32 = arith.constant 0 : i32
    %c0_i32_0 = arith.constant 0 : i32
    %c0_i32_1 = arith.constant 0 : i32
    return %arg1, %c0_i32, %c0_i32_0 : i32, i32, i32
  }
  func.func @transform_3(%arg0: i32, %arg1: i32) -> (i32, i32, i32) {
    %c0_i32 = arith.constant 0 : i32
    %c0_i32_0 = arith.constant 0 : i32
    %c0_i32_1 = arith.constant 0 : i32
    return %arg1, %c0_i32, %c0_i32_0 : i32, i32, i32
  }
  func.func @transform_4(%arg0: i32, %arg1: i32) -> (i32, i32, i32) {
    %c0_i32 = arith.constant 0 : i32
    %c0_i32_0 = arith.constant 0 : i32
    %c0_i32_1 = arith.constant 0 : i32
    return %arg1, %c0_i32, %c0_i32_0 : i32, i32, i32
  }
  func.func @transform_5(%arg0: i32, %arg1: i32) -> (i32, i32, i32) {
    %c0_i32 = arith.constant 0 : i32
    %c0_i32_0 = arith.constant 0 : i32
    %c0_i32_1 = arith.constant 0 : i32
    return %arg1, %c0_i32, %c0_i32_0 : i32, i32, i32
  }
  func.func @transform_6(%arg0: i32, %arg1: i32) -> (i32, i32, i32) {
    %c0_i32 = arith.constant 0 : i32
    %c0_i32_0 = arith.constant 0 : i32
    %c0_i32_1 = arith.constant 0 : i32
    %c0_i32_2 = arith.constant 0 : i32
    return %c0_i32, %c0_i32_0, %c0_i32_1 : i32, i32, i32
  }
  func.func @transform_7(%arg0: i32, %arg1: i32) -> (i32, i32, i32) {
    %c0_i32 = arith.constant 0 : i32
    %c0_i32_0 = arith.constant 0 : i32
    %c0_i32_1 = arith.constant 0 : i32
    return %arg0, %c0_i32, %c0_i32_0 : i32, i32, i32
  }
}

</mosaic_0001>

<llo_original>
// kernel: tpu_custom_call.1
$region0: #{tpu_custom_call.1}
  #allocation0 [shape = 'u32[]', space=smem, size = 0x4, offset = 0x4, fixed_abs, tag = 'smem constant byte address 0x4 - core index']
  #allocation1 [shape = 'u32[144,128]{1,0:T(1,128)}', space=vmem, size = 0x12000, scoped, tag = 'internal scratch']
  %s0 = inlined_call_operand.vmem [shape: f32[4,8,32], index: 0, kind: input, shape index: {}]
  %s1 = inlined_call_operand.vmem [shape: bf16[4,32,8], index: 1, kind: input, shape index: {}]
  %s2 = inlined_call_operand.vmem [shape: f32[4,1,8], index: 2, kind: input, shape index: {}]
  %s3 = inlined_call_operand.vmem [shape: bf16[4,32,8], index: 3, kind: input, shape index: {}]
  %s4 = inlined_call_operand.vmem [shape: f32[4,1,8], index: 4, kind: input, shape index: {}]
  %s5 = inlined_call_operand.vmem [shape: bf16[4,8,32], index: 5, kind: input, shape index: {}]
  %s6 = inlined_call_operand.vmem [shape: f32[1,1,32], index: 6, kind: input, shape index: {}]
  %s7 = inlined_call_operand.hbm [shape: f32[4,8,32], index: 7, kind: output, shape index: {}]
  %s8 = sld [smem:[#allocation0]]
  $region65: #{tpu_custom_call.1} parent=0
    _
  %s10 = ssub.s32 1, %s8
  %s11 = scalar_select 0, %s10, %s8
  $region1: #{tpu_custom_call.1} parent=0
    #allocation2 [shape = 'u8[16384]{0}', space=vmem, size = 0x4000, scoped, tag = 'output window, operand 0']
    #allocation3 [shape = 's32[2]{0}', space=sflag, size = 0x8, scoped, tag = 'scoped memory for tpu_custom_call.1']
    %12 = vsyncpa [#allocation3], 0
    %s13 = scalar_lea.sflag [#allocation3], 1
    %14 = vsyncpa %s13, 0
    loop: start=0, step=1, limit=10
    $region2: #{tpu_custom_call.1} parent=1 // loop_pre_header
      _
    $region3: #{tpu_custom_call.1} parent=1 // loop_header
      %s16 = sphi 0, %s20
      %p17 = scmp.ge.s32.totalorder %s16, 10
      %s23 = sphi 0, %s35
      %s24 = sphi 0, %s31
      %s25 = sphi 0, %s23
      %s26 = sphi 0, %s24
      %s27 = sphi 0, %s25
      %s28 = sphi 0, %s26
      %s38 = sphi 0, %s40
      %s41 = sphi 0, %s38
      %s42 = sphi 0, %s41
      %s58 = sphi 0, %s42
      %s64 = sphi 0, %s66
      %s67 = sphi 0, %s64
      %s68 = sphi 0, %s67
      %s84 = sphi 0, %s68
      %s90 = sphi 0, %s92
      %s93 = sphi 0, %s90
      %s94 = sphi 0, %s93
      %s110 = sphi 0, %s94
      %s116 = sphi 0, %s118
      %s119 = sphi 0, %s116
      %s120 = sphi 0, %s119
      %s136 = sphi 0, %s120
      %s142 = sphi 0, %s144
      %s145 = sphi 0, %s142
      %s146 = sphi 0, %s145
      %s162 = sphi 0, %s146
      %s168 = sphi 0, %s170
      %s171 = sphi 0, %s168
      %s172 = sphi 0, %s171
      %s188 = sphi 0, %s172
      %s192 = sphi 0, %s192
      %s194 = sphi 0, %s192
      %s195 = sphi 0, %s194
      %s209 = sphi 0, %s195
      %s215 = sphi 0, %s217
      %s218 = sphi 0, %s215
      %s219 = sphi 0, %s218
      %s235 = sphi 0, %s219
    $region4: #{tpu_custom_call.1} parent=1 // loop_header_branch
      %19 = sbr.rel (%p17) target = $region8
    $region5: #{tpu_custom_call.1} parent=1 // loop_body
      %s21 = ssub.s32 %s16, 1
      %s22 = ssub.s32 %s16, 2
      %s29 = sadd.s32 1, %s24
      %p30 = scmp.ge.s32.totalorder %s29, 4
      %s31 = scalar_select %p30, 0, %s29
      %s32 = sadd.s32 1, %s23
      %s33 = scalar_select %p30, %s32, %s23
      %p34 = scmp.ge.s32.totalorder %s33, 2
      %s35 = scalar_select %p34, 0, %s33
      %s36 = ssub.s32 %s23, %s35
      %p37 = scmp.eq.s32.totalorder %s36, 0
      %s39 = sadd.s32 %s38, 1
      %s40 = scalar_select %p37, %s38, %s39
      %p43 = pneg %p37
      %p44 = scmp.eq.s32.totalorder %s16, 7
      %p45 = por %p43, %p44
      %p46 = scmp.ne.s32.totalorder %s38, %s41
      %p47 = scmp.eq.s32.totalorder %s16, 0
      %p48 = por %p46, %p47
      %p49 = scmp.ne.s32.totalorder %s38, %s41
      %p50 = scmp.eq.s32.totalorder %s21, 7
      %p51 = por %p49, %p50
      %p52 = scmp.ne.s32.totalorder %s41, %s42
      %p53 = scmp.eq.s32.totalorder %s21, 0
      %p54 = por %p52, %p53
      %p55 = scmp.ne.s32.totalorder %s41, %s42
      %p56 = scmp.eq.s32.totalorder %s22, 7
      %p57 = por %p55, %p56
      %p59 = scmp.ne.s32.totalorder %s42, %s58
      %p60 = scmp.eq.s32.totalorder %s22, 0
      %p61 = por %p59, %p60
      %s62 = ssub.s32 %s24, %s31
      %p63 = scmp.eq.s32.totalorder %s62, 0
      %s65 = sadd.s32 %s64, 1
      %s66 = scalar_select %p63, %s64, %s65
      %p69 = pneg %p63
      %p70 = scmp.eq.s32.totalorder %s16, 7
      %p71 = por %p69, %p70
      %p72 = scmp.ne.s32.totalorder %s64, %s67
      %p73 = scmp.eq.s32.totalorder %s16, 0
      %p74 = por %p72, %p73
      %p75 = scmp.ne.s32.totalorder %s64, %s67
      %p76 = scmp.eq.s32.totalorder %s21, 7
      %p77 = por %p75, %p76
      %p78 = scmp.ne.s32.totalorder %s67, %s68
      %p79 = scmp.eq.s32.totalorder %s21, 0
      %p80 = por %p78, %p79
      %p81 = scmp.ne.s32.totalorder %s67, %s68
      %p82 = scmp.eq.s32.totalorder %s22, 7
      %p83 = por %p81, %p82
      %p85 = scmp.ne.s32.totalorder %s68, %s84
      %p86 = scmp.eq.s32.totalorder %s22, 0
      %p87 = por %p85, %p86
      %s88 = ssub.s32 %s24, %s31
      %p89 = scmp.eq.s32.totalorder %s88, 0
      %s91 = sadd.s32 %s90, 1
      %s92 = scalar_select %p89, %s90, %s91
      %p95 = pneg %p89
      %p96 = scmp.eq.s32.totalorder %s16, 7
      %p97 = por %p95, %p96
      %p98 = scmp.ne.s32.totalorder %s90, %s93
      %p99 = scmp.eq.s32.totalorder %s16, 0
      %p100 = por %p98, %p99
      %p101 = scmp.ne.s32.totalorder %s90, %s93
      %p102 = scmp.eq.s32.totalorder %s21, 7
      %p103 = por %p101, %p102
      %p104 = scmp.ne.s32.totalorder %s93, %s94
      %p105 = scmp.eq.s32.totalorder %s21, 0
      %p106 = por %p104, %p105
      %p107 = scmp.ne.s32.totalorder %s93, %s94
      %p108 = scmp.eq.s32.totalorder %s22, 7
      %p109 = por %p107, %p108
      %p111 = scmp.ne.s32.totalorder %s94, %s110
      %p112 = scmp.eq.s32.totalorder %s22, 0
      %p113 = por %p111, %p112
      %s114 = ssub.s32 %s24, %s31
      %p115 = scmp.eq.s32.totalorder %s114, 0
      %s117 = sadd.s32 %s116, 1
      %s118 = scalar_select %p115, %s116, %s117
      %p121 = pneg %p115
      %p122 = scmp.eq.s32.totalorder %s16, 7
      %p123 = por %p121, %p122
      %p124 = scmp.ne.s32.totalorder %s116, %s119
      %p125 = scmp.eq.s32.totalorder %s16, 0
      %p126 = por %p124, %p125
      %p127 = scmp.ne.s32.totalorder %s116, %s119
      %p128 = scmp.eq.s32.totalorder %s21, 7
      %p129 = por %p127, %p128
      %p130 = scmp.ne.s32.totalorder %s119, %s120
      %p131 = scmp.eq.s32.totalorder %s21, 0
      %p132 = por %p130, %p131
      %p133 = scmp.ne.s32.totalorder %s119, %s120
      %p134 = scmp.eq.s32.totalorder %s22, 7
      %p135 = por %p133, %p134
      %p137 = scmp.ne.s32.totalorder %s120, %s136
      %p138 = scmp.eq.s32.totalorder %s22, 0
      %p139 = por %p137, %p138
      %s140 = ssub.s32 %s24, %s31
      %p141 = scmp.eq.s32.totalorder %s140, 0
      %s143 = sadd.s32 %s142, 1
      %s144 = scalar_select %p141, %s142, %s143
      %p147 = pneg %p141
      %p148 = scmp.eq.s32.totalorder %s16, 7
      %p149 = por %p147, %p148
      %p150 = scmp.ne.s32.totalorder %s142, %s145
      %p151 = scmp.eq.s32.totalorder %s16, 0
      %p152 = por %p150, %p151
      %p153 = scmp.ne.s32.totalorder %s142, %s145
      %p154 = scmp.eq.s32.totalorder %s21, 7
      %p155 = por %p153, %p154
      %p156 = scmp.ne.s32.totalorder %s145, %s146
      %p157 = scmp.eq.s32.totalorder %s21, 0
      %p158 = por %p156, %p157
      %p159 = scmp.ne.s32.totalorder %s145, %s146
      %p160 = scmp.eq.s32.totalorder %s22, 7
      %p161 = por %p159, %p160
      %p163 = scmp.ne.s32.totalorder %s146, %s162
      %p164 = scmp.eq.s32.totalorder %s22, 0
      %p165 = por %p163, %p164
      %s166 = ssub.s32 %s24, %s31
      %p167 = scmp.eq.s32.totalorder %s166, 0
      %s169 = sadd.s32 %s168, 1
      %s170 = scalar_select %p167, %s168, %s169
      %p173 = pneg %p167
      %p174 = scmp.eq.s32.totalorder %s16, 7
      %p175 = por %p173, %p174
      %p176 = scmp.ne.s32.totalorder %s168, %s171
      %p177 = scmp.eq.s32.totalorder %s16, 0
      %p178 = por %p176, %p177
      %p179 = scmp.ne.s32.totalorder %s168, %s171
      %p180 = scmp.eq.s32.totalorder %s21, 7
      %p181 = por %p179, %p180
      %p182 = scmp.ne.s32.totalorder %s171, %s172
      %p183 = scmp.eq.s32.totalorder %s21, 0
      %p184 = por %p182, %p183
      %p185 = scmp.ne.s32.totalorder %s171, %s172
      %p186 = scmp.eq.s32.totalorder %s22, 7
      %p187 = por %p185, %p186
      %p189 = scmp.ne.s32.totalorder %s172, %s188
      %p190 = scmp.eq.s32.totalorder %s22, 0
      %p191 = por %p189, %p190
      %s193 = sadd.s32 %s192, 1
      %p196 = scmp.eq.s32.totalorder %s16, 7
      %p197 = scmp.ne.s32.totalorder %s192, %s194
      %p198 = scmp.eq.s32.totalorder %s16, 0
      %p199 = por %p197, %p198
      %p200 = scmp.ne.s32.totalorder %s192, %s194
      %p201 = scmp.eq.s32.totalorder %s21, 7
      %p202 = por %p200, %p201
      %p203 = scmp.ne.s32.totalorder %s194, %s195
      %p204 = scmp.eq.s32.totalorder %s21, 0
      %p205 = por %p203, %p204
      %p206 = scmp.ne.s32.totalorder %s194, %s195
      %p207 = scmp.eq.s32.totalorder %s22, 7
      %p208 = por %p206, %p207
      %p210 = scmp.ne.s32.totalorder %s195, %s209
      %p211 = scmp.eq.s32.totalorder %s22, 0
      %p212 = por %p210, %p211
      %s213 = ssub.s32 %s23, %s35
      %p214 = scmp.eq.s32.totalorder %s213, 0
      %s216 = sadd.s32 %s215, 1
      %s217 = scalar_select %p214, %s215, %s216
      %p220 = pneg %p214
      %p221 = scmp.eq.s32.totalorder %s16, 7
      %p222 = por %p220, %p221
      %p223 = scmp.ne.s32.totalorder %s215, %s218
      %p224 = scmp.eq.s32.totalorder %s16, 0
      %p225 = por %p223, %p224
      %p226 = scmp.ne.s32.totalorder %s215, %s218
      %p227 = scmp.eq.s32.totalorder %s21, 7
      %p228 = por %p226, %p227
      %p229 = scmp.ne.s32.totalorder %s218, %s219
      %p230 = scmp.eq.s32.totalorder %s21, 0
      %p231 = por %p229, %p230
      %p232 = scmp.ne.s32.totalorder %s218, %s219
      %p233 = scmp.eq.s32.totalorder %s22, 7
      %p234 = por %p232, %p233
      %p236 = scmp.ne.s32.totalorder %s219, %s235
      %p237 = scmp.eq.s32.totalorder %s22, 0
      %p238 = por %p236, %p237
      %p239 = scmp.le.s32.totalorder 1, %s16
      %p240 = scmp.lt.s32.totalorder %s16, 9
      %p241 = pnand %p239, %p240
      %p242 = pneg %p241
      // Predicated region
      $region9: #{tpu_custom_call.1} parent=5 // pred_check
        _
      $region10: #{tpu_custom_call.1} parent=5 // pred_check_branch
        %244 = sbr.rel (%p241) target = $region12
      $region11: #{tpu_custom_call.1} parent=5 // pred_region
        %s245 = ssub.s32 %s16, 1
        // Predicated region
        $region13: #{tpu_custom_call.1} parent=11 // pred_check
          %p246 = pneg %p205
        $region14: #{tpu_custom_call.1} parent=11 // pred_check_branch
          %248 = sbr.rel (%p246) target = $region16
        $region15: #{tpu_custom_call.1} parent=11 // pred_region
          _
        $region16: #{tpu_custom_call.1} parent=11 // pred_fallthru
          _
      $region12: #{tpu_custom_call.1} parent=5 // pred_fallthru
        _
      %p249 = scmp.lt.s32.totalorder %s16, 8
      // Predicated region
      $region17: #{tpu_custom_call.1} parent=5 // pred_check
        %p250 = pneg %p249
      $region18: #{tpu_custom_call.1} parent=5 // pred_check_branch
        %252 = sbr.rel (%p250) target = $region20
      $region19: #{tpu_custom_call.1} parent=5 // pred_region
        // Predicated region
        $region21: #{tpu_custom_call.1} parent=19 // pred_check
          %p253 = pneg %p48
        $region22: #{tpu_custom_call.1} parent=19 // pred_check_branch
          %255 = sbr.rel (%p253) target = $region24
        $region23: #{tpu_custom_call.1} parent=19 // pred_region
          %s256 = smul.u32 2, %s23
          %p257 = scmp.lt.s32.totalorder %s256, 3
          %s258 = scalar_select %p257, %s256, 3
          %s259 = smul.addr %s258, 8
          %s260 = scalar_lea.vmem %s0, %s259
          %s261 = smul.u32 2, %s23
        $region24: #{tpu_custom_call.1} parent=19 // pred_fallthru
          _
        // Predicated region
        $region25: #{tpu_custom_call.1} parent=19 // pred_check
          %p262 = pneg %p74
        $region26: #{tpu_custom_call.1} parent=19 // pred_check_branch
          %264 = sbr.rel (%p262) target = $region28
        $region27: #{tpu_custom_call.1} parent=19 // pred_region
          %p265 = scmp.lt.s32.totalorder %s24, 3
          %s266 = scalar_select %p265, %s24, 3
          %s267 = smul.addr %s266, 4
          %s268 = smul.addr %s267, 4
          %s269 = scalar_lea.vmem %s1, %s268
        $region28: #{tpu_custom_call.1} parent=19 // pred_fallthru
          _
        // Predicated region
        $region29: #{tpu_custom_call.1} parent=19 // pred_check
          %p270 = pneg %p100
        $region30: #{tpu_custom_call.1} parent=19 // pred_check_branch
          %272 = sbr.rel (%p270) target = $region32
        $region31: #{tpu_custom_call.1} parent=19 // pred_region
          %p273 = scmp.lt.s32.totalorder %s24, 3
          %s274 = scalar_select %p273, %s24, 3
          %s275 = scalar_lea.vmem %s2, %s274
        $region32: #{tpu_custom_call.1} parent=19 // pred_fallthru
          _
        // Predicated region
        $region33: #{tpu_custom_call.1} parent=19 // pred_check
          %p276 = pneg %p126
        $region34: #{tpu_custom_call.1} parent=19 // pred_check_branch
          %278 = sbr.rel (%p276) target = $region36
        $region35: #{tpu_custom_call.1} parent=19 // pred_region
          %p279 = scmp.lt.s32.totalorder %s24, 3
          %s280 = scalar_select %p279, %s24, 3
          %s281 = smul.addr %s280, 4
          %s282 = smul.addr %s281, 4
          %s283 = scalar_lea.vmem %s3, %s282
        $region36: #{tpu_custom_call.1} parent=19 // pred_fallthru
          _
        // Predicated region
        $region37: #{tpu_custom_call.1} parent=19 // pred_check
          %p284 = pneg %p152
        $region38: #{tpu_custom_call.1} parent=19 // pred_check_branch
          %286 = sbr.rel (%p284) target = $region40
        $region39: #{tpu_custom_call.1} parent=19 // pred_region
          %p287 = scmp.lt.s32.totalorder %s24, 3
          %s288 = scalar_select %p287, %s24, 3
          %s289 = scalar_lea.vmem %s4, %s288
        $region40: #{tpu_custom_call.1} parent=19 // pred_fallthru
          _
        // Predicated region
        $region41: #{tpu_custom_call.1} parent=19 // pred_check
          %p290 = pneg %p178
        $region42: #{tpu_custom_call.1} parent=19 // pred_check_branch
          %292 = sbr.rel (%p290) target = $region44
        $region43: #{tpu_custom_call.1} parent=19 // pred_region
          %p293 = scmp.lt.s32.totalorder %s24, 3
          %s294 = scalar_select %p293, %s24, 3
          %s295 = smul.addr %s294, 4
          %s296 = scalar_lea.vmem %s5, %s295
        $region44: #{tpu_custom_call.1} parent=19 // pred_fallthru
          _
      $region20: #{tpu_custom_call.1} parent=5 // pred_fallthru
        _
      %p297 = scmp.le.s32.totalorder 1, %s16
      %p298 = scmp.lt.s32.totalorder %s16, 9
      %p299 = pnand %p297, %p298
      %p300 = pneg %p299
      // Predicated region
      $region45: #{tpu_custom_call.1} parent=5 // pred_check
        _
      $region46: #{tpu_custom_call.1} parent=5 // pred_check_branch
        %302 = sbr.rel (%p299) target = $region48
      $region47: #{tpu_custom_call.1} parent=5 // pred_region
        %s303 = ssub.s32 %s16, 1
        %s304 = smul.u32 2, %s25
        %p305 = scmp.lt.s32.totalorder %s304, 3
        %s306 = scalar_select %p305, %s304, 3
        %s307 = smul.addr %s306, 8
        %s308 = scalar_lea.vmem %s0, %s307
        %p309 = pneg %p54
        %p310 = pneg %p51
        %p311 = scmp.lt.s32.totalorder %s26, 3
        %s312 = scalar_select %p311, %s26, 3
        %s313 = smul.addr %s312, 4
        %s314 = smul.addr %s313, 4
        %s315 = scalar_lea.vmem %s1, %s314
        %p316 = pneg %p80
        %p317 = pneg %p77
        %p318 = scmp.lt.s32.totalorder %s26, 3
        %s319 = scalar_select %p318, %s26, 3
        %s320 = scalar_lea.vmem %s2, %s319
        %p321 = pneg %p106
        %p322 = pneg %p103
        %p323 = scmp.lt.s32.totalorder %s26, 3
        %s324 = scalar_select %p323, %s26, 3
        %s325 = smul.addr %s324, 4
        %s326 = smul.addr %s325, 4
        %s327 = scalar_lea.vmem %s3, %s326
        %p328 = pneg %p132
        %p329 = pneg %p129
        %p330 = scmp.lt.s32.totalorder %s26, 3
        %s331 = scalar_select %p330, %s26, 3
        %s332 = scalar_lea.vmem %s4, %s331
        %p333 = pneg %p158
        %p334 = pneg %p155
        %p335 = scmp.lt.s32.totalorder %s26, 3
        %s336 = scalar_select %p335, %s26, 3
        %s337 = smul.addr %s336, 4
        %s338 = scalar_lea.vmem %s5, %s337
        %p339 = pneg %p184
        %p340 = pneg %p181
        %p341 = pneg %p205
        %p342 = pneg %p202
        %p343 = pneg %p231
        %p344 = pneg %p228
        %s345 = sand.u32 %s218, 1
        %s346 = scalar_lea.sflag [#allocation3], %s345
        %s347 = sand.u32 %s218, 1
        %s348 = smul.addr %s347, 16
        %s349 = scalar_lea.vmem [#allocation2], %s348
        %s350 = smul.u32 2, %s25
        %p351 = scmp.lt.s32.totalorder %s350, 3
        %s352 = scalar_select %p351, %s350, 3
        %s353 = smul.addr %s352, 8
        %s354 = scalar_lea.vmem %s0, %s353
        %s355 = smul.u32 2, %s25
        %p356 = scmp.lt.s32.totalorder %s26, 3
        %s357 = scalar_select %p356, %s26, 3
        %s358 = smul.addr %s357, 4
        %s359 = smul.addr %s358, 4
        %s360 = scalar_lea.vmem %s1, %s359
        %p361 = scmp.lt.s32.totalorder %s26, 3
        %s362 = scalar_select %p361, %s26, 3
        %s363 = scalar_lea.vmem %s2, %s362
        %p364 = scmp.lt.s32.totalorder %s26, 3
        %s365 = scalar_select %p364, %s26, 3
        %s366 = smul.addr %s365, 4
        %s367 = smul.addr %s366, 4
        %s368 = scalar_lea.vmem %s3, %s367
        %p369 = scmp.lt.s32.totalorder %s26, 3
        %s370 = scalar_select %p369, %s26, 3
        %s371 = scalar_lea.vmem %s4, %s370
        %p372 = scmp.lt.s32.totalorder %s26, 3
        %s373 = scalar_select %p372, %s26, 3
        %s374 = smul.addr %s373, 4
        %s375 = scalar_lea.vmem %s5, %s374
        %s376 = smul.u32 2, %s25
        %v378 = vld [vmem:[%s354] sm:$0xff]
        %v379 = vld [vmem:[%s354 + $0x8] sm:$0xff]
        %v380 = vpack.c.bf16 %v379, %v378
        %v381 = vld [vmem:[%s360] sm:$0xf]
        %v382 = vld [vmem:[%s360 + $0x4] sm:$0xf]
        %v383 = vld [vmem:[%s360 + $0x8] sm:$0xf]
        %v384 = vld [vmem:[%s360 + $0xc] sm:$0xf]
        %v385 = vld [vmem:[%s363] sm:$0x1]
        %v387 = vlaneseq
        %v388 = vshrl.u32 %v387, 7
        %v389 = vsub.s32 0, %v388
        %v390 = vrot.slane %v385, %v389
        %v396 = vunpack.c.l.b16 %v381
        %v397 = vunpack.c.l.b16 %v382
        %v398 = vunpack.c.l.b16 %v383
        %v399 = vunpack.c.l.b16 %v384
        %v400 = vpack.c.b16 %v397, %v396
        %v401 = vpack.c.b16 %v399, %v398
        %vm404 = vcmask 261120
        %v406 = vsel %vm404, %v380, 0
        %408 = vmatprep.subr.bf16.mxu0 0
        %409 = vmatpush1.bf16.msra.mxu0 %v400
        %410 = vmatprep.subr.bf16.mxu0 0
        %411 = vmatpush1.bf16.msra.mxu0 %v401
        %412 = vmatprep.subr.bf16.mxu0 0
        %413 = vmatpush1.bf16.msra.mxu0 0
        %414 = vmatprep.subr.bf16.mxu0 0
        %415 = vmatpush1.bf16.msra.mxu0 0
        %416 = vmatprep.subr.bf16.mxu0 0
        %417 = vmatpush1.bf16.msra.mxu0 0
        %418 = vmatprep.subr.bf16.mxu0 0
        %419 = vmatpush1.bf16.msra.mxu0 0
        %420 = vmatprep.subr.bf16.mxu0 0
        %421 = vmatpush1.bf16.msra.mxu0 0
        %422 = vmatprep.subr.bf16.mxu0 0
        %423 = vmatpush1.bf16.msra.mxu0 0
        %424 = vmatprep.subr.bf16.mxu0 0
        %425 = vmatpush1.bf16.msra.mxu0 0
        %426 = vmatprep.subr.bf16.mxu0 0
        %427 = vmatpush1.bf16.msra.mxu0 0
        %428 = vmatprep.subr.bf16.mxu0 0
        %429 = vmatpush1.bf16.msra.mxu0 0
        %430 = vmatprep.subr.bf16.mxu0 0
        %431 = vmatpush1.bf16.msra.mxu0 0
        %432 = vmatprep.subr.bf16.mxu0 0
        %433 = vmatpush1.bf16.msra.mxu0 0
        %434 = vmatprep.subr.bf16.mxu0 0
        %435 = vmatpush1.bf16.msra.mxu0 0
        %436 = vmatprep.subr.bf16.mxu0 0
        %437 = vmatpush1.bf16.msra.mxu0 0
        %438 = vmatprep.subr.bf16.mxu0 0
        %439 = vmatpush1.bf16.msra.mxu0 0
        %440 = vmatprep.mubr.bf16.mxu0 0
        %441 = vmatmul.mubr.bf16.gmra.mrb[0].mxu0 %v406
        %v442 = vpop.f32.mrb[0].mxu0
        %v443 = vadd.f32 %v390, %v442
        %v444 = vpop.f32.mrb[0].mxu0
        %v445 = vpop.f32.mrb[0].mxu0
        %v446 = vadd.f32 %v390, %v445
        %v447 = vpop.f32.mrb[0].mxu0
        %448 = vdwg.mxu0
        %v449 = vld [vmem:[%s368] sm:$0xf]
        %v450 = vld [vmem:[%s368 + $0x4] sm:$0xf]
        %v451 = vld [vmem:[%s368 + $0x8] sm:$0xf]
        %v452 = vld [vmem:[%s368 + $0xc] sm:$0xf]
        %v453 = vld [vmem:[%s371] sm:$0x1]
        %v455 = vlaneseq
        %v456 = vshrl.u32 %v455, 7
        %v457 = vsub.s32 0, %v456
        %v458 = vrot.slane %v453, %v457
        %v464 = vunpack.c.l.b16 %v449
        %v465 = vunpack.c.l.b16 %v450
        %v466 = vunpack.c.l.b16 %v451
        %v467 = vunpack.c.l.b16 %v452
        %v468 = vpack.c.b16 %v465, %v464
        %v469 = vpack.c.b16 %v467, %v466
        %472 = vmatprep.subr.bf16.mxu0 0
        %473 = vmatpush1.bf16.msra.mxu0 %v468
        %474 = vmatprep.subr.bf16.mxu0 0
        %475 = vmatpush1.bf16.msra.mxu0 %v469
        %476 = vmatprep.subr.bf16.mxu0 0
        %477 = vmatpush1.bf16.msra.mxu0 0
        %478 = vmatprep.subr.bf16.mxu0 0
        %479 = vmatpush1.bf16.msra.mxu0 0
        %480 = vmatprep.subr.bf16.mxu0 0
        %481 = vmatpush1.bf16.msra.mxu0 0
        %482 = vmatprep.subr.bf16.mxu0 0
        %483 = vmatpush1.bf16.msra.mxu0 0
        %484 = vmatprep.subr.bf16.mxu0 0
        %485 = vmatpush1.bf16.msra.mxu0 0
        %486 = vmatprep.subr.bf16.mxu0 0
        %487 = vmatpush1.bf16.msra.mxu0 0
        %488 = vmatprep.subr.bf16.mxu0 0
        %489 = vmatpush1.bf16.msra.mxu0 0
        %490 = vmatprep.subr.bf16.mxu0 0
        %491 = vmatpush1.bf16.msra.mxu0 0
        %492 = vmatprep.subr.bf16.mxu0 0
        %493 = vmatpush1.bf16.msra.mxu0 0
        %494 = vmatprep.subr.bf16.mxu0 0
        %495 = vmatpush1.bf16.msra.mxu0 0
        %496 = vmatprep.subr.bf16.mxu0 0
        %497 = vmatpush1.bf16.msra.mxu0 0
        %498 = vmatprep.subr.bf16.mxu0 0
        %499 = vmatpush1.bf16.msra.mxu0 0
        %500 = vmatprep.subr.bf16.mxu0 0
        %501 = vmatpush1.bf16.msra.mxu0 0
        %502 = vmatprep.subr.bf16.mxu0 0
        %503 = vmatpush1.bf16.msra.mxu0 0
        %504 = vmatprep.mubr.bf16.mxu0 0
        %505 = vmatmul.mubr.bf16.gmra.mrb[0].mxu0 %v406
        %v506 = vpop.f32.mrb[0].mxu0
        %v507 = vadd.f32 %v458, %v506
        %v508 = vpop.f32.mrb[0].mxu0
        %v509 = vpop.f32.mrb[0].mxu0
        %v510 = vadd.f32 %v458, %v509
        %v511 = vpop.f32.mrb[0].mxu0
        %512 = vdwg.mxu0
        %v513 = vpack.c.bf16 %v443, %v443
        %v514 = vpack.c.bf16 %v446, %v446
        %v515 = vpack.c.bf16 %v507, %v507
        %v516 = vpack.c.bf16 %v510, %v510
        %vm517 = vcmask 64512
        %v519 = vsel %vm517, %v513, 0
        %521 = vmatprep.subr.bf16.mxu0 0
        %522 = vmatpush1.bf16.xpose.msra.mxu0 %v519
        %523 = vmatprep.subr.bf16.mxu0 0
        %524 = vmatpush1.bf16.xpose.msra.mxu0 0
        %525 = vmatprep.subr.bf16.mxu0 0
        %526 = vmatpush1.bf16.xpose.msra.mxu0 0
        %527 = vmatprep.subr.bf16.mxu0 0
        %528 = vmatpush1.bf16.xpose.msra.mxu0 0
        %529 = vmatprep.subr.bf16.mxu0 0
        %530 = vmatpush1.bf16.xpose.msra.mxu0 0
        %531 = vmatprep.subr.bf16.mxu0 0
        %532 = vmatpush1.bf16.xpose.msra.mxu0 0
        %533 = vmatprep.subr.bf16.mxu0 0
        %534 = vmatpush1.bf16.xpose.msra.mxu0 0
        %535 = vmatprep.subr.bf16.mxu0 0
        %536 = vmatpush1.bf16.xpose.msra.mxu0 0
        %537 = vmatprep.subr.bf16.mxu0 0
        %538 = vmatpush1.bf16.xpose.msra.mxu0 0
        %539 = vmatprep.subr.bf16.mxu0 0
        %540 = vmatpush1.bf16.xpose.msra.mxu0 0
        %541 = vmatprep.subr.bf16.mxu0 0
        %542 = vmatpush1.bf16.xpose.msra.mxu0 0
        %543 = vmatprep.subr.bf16.mxu0 0
        %544 = vmatpush1.bf16.xpose.msra.mxu0 0
        %545 = vmatprep.subr.bf16.mxu0 0
        %546 = vmatpush1.bf16.xpose.msra.mxu0 0
        %547 = vmatprep.subr.bf16.mxu0 0
        %548 = vmatpush1.bf16.xpose.msra.mxu0 0
        %549 = vmatprep.subr.bf16.mxu0 0
        %550 = vmatpush1.bf16.xpose.msra.mxu0 0
        %551 = vmatprep.subr.bf16.mxu0 0
        %552 = vmatpush1.bf16.xpose.msra.mxu0 0
        %553 = vmatprep.mubr.bf16.mxu0 0
        %554 = vmatmul.mubr.bf16.gmra.mrb[0].mxu0 %v519
        %v555 = vpop.f32.mrb[0].mxu0
        %v556 = vadd.f32 0.0, %v555
        %v557 = vpop.f32.mrb[0].mxu0
        %v558 = vpop.f32.mrb[0].mxu0
        %v559 = vpop.f32.mrb[0].mxu0
        %560 = vdwg.mxu0
        %v562 = vsel %vm517, %v514, 0
        %564 = vmatprep.subr.bf16.mxu0 0
        %565 = vmatpush1.bf16.xpose.msra.mxu0 %v562
        %566 = vmatprep.subr.bf16.mxu0 0
        %567 = vmatpush1.bf16.xpose.msra.mxu0 0
        %568 = vmatprep.subr.bf16.mxu0 0
        %569 = vmatpush1.bf16.xpose.msra.mxu0 0
        %570 = vmatprep.subr.bf16.mxu0 0
        %571 = vmatpush1.bf16.xpose.msra.mxu0 0
        %572 = vmatprep.subr.bf16.mxu0 0
        %573 = vmatpush1.bf16.xpose.msra.mxu0 0
        %574 = vmatprep.subr.bf16.mxu0 0
        %575 = vmatpush1.bf16.xpose.msra.mxu0 0
        %576 = vmatprep.subr.bf16.mxu0 0
        %577 = vmatpush1.bf16.xpose.msra.mxu0 0
        %578 = vmatprep.subr.bf16.mxu0 0
        %579 = vmatpush1.bf16.xpose.msra.mxu0 0
        %580 = vmatprep.subr.bf16.mxu0 0
        %581 = vmatpush1.bf16.xpose.msra.mxu0 0
        %582 = vmatprep.subr.bf16.mxu0 0
        %583 = vmatpush1.bf16.xpose.msra.mxu0 0
        %584 = vmatprep.subr.bf16.mxu0 0
        %585 = vmatpush1.bf16.xpose.msra.mxu0 0
        %586 = vmatprep.subr.bf16.mxu0 0
        %587 = vmatpush1.bf16.xpose.msra.mxu0 0
        %588 = vmatprep.subr.bf16.mxu0 0
        %589 = vmatpush1.bf16.xpose.msra.mxu0 0
        %590 = vmatprep.subr.bf16.mxu0 0
        %591 = vmatpush1.bf16.xpose.msra.mxu0 0
        %592 = vmatprep.subr.bf16.mxu0 0
        %593 = vmatpush1.bf16.xpose.msra.mxu0 0
        %594 = vmatprep.subr.bf16.mxu0 0
        %595 = vmatpush1.bf16.xpose.msra.mxu0 0
        %596 = vmatprep.mubr.bf16.mxu0 0
        %597 = vmatmul.mubr.bf16.gmra.mrb[0].mxu0 %v562
        %v598 = vpop.f32.mrb[0].mxu0
        %v599 = vadd.f32 0.0, %v598
        %v600 = vpop.f32.mrb[0].mxu0
        %v601 = vpop.f32.mrb[0].mxu0
        %v602 = vpop.f32.mrb[0].mxu0
        %603 = vdwg.mxu0
        %v604 = vmul.f32 %v556, 0.35355338
        %v605 = vmul.f32 %v599, 0.35355338
        %v606 = vsel %vm517, %v604, -inf
        %607 = vmax.xlane.f32.xlu0 %v606
        %v608 = vpop.xlane.xlu0 %607
        %v609 = vsel %vm517, %v605, -inf
        %610 = vmax.xlane.f32.xlu0 %v609
        %v611 = vpop.xlane.xlu0 %610
        %v612 = vsub.f32 %v604, %v608
        %v613 = vsub.f32 %v605, %v611
        %v614 = vmul.f32 %v612, 1.442695
        %v615 = vpow.pop %v614
        %v616 = vmul.f32 %v613, 1.442695
        %v617 = vpow.pop %v616
        %v618 = vsel %vm517, %v615, 0.0
        %619 = vadd.xlane.f32.xlu0 %v618
        %v620 = vpop.xlane.xlu0 %619
        %v621 = vsel %vm517, %v617, 0.0
        %622 = vadd.xlane.f32.xlu0 %v621
        %v623 = vpop.xlane.xlu0 %622
        %v624 = vrcp.pop %v620
        %v625 = vrcp.pop %v623
        %v626 = vmul.f32 %v615, %v624
        %v627 = vmul.f32 %v617, %v625
        %v628 = vpack.c.bf16 %v626, %v626
        %v629 = vpack.c.bf16 %v627, %v627
        %v631 = vsel %vm517, %v628, 0
        %vm633 = vcmask 1043456
        %v635 = vsel %vm633, %v515, 0
        %637 = vmatprep.subr.bf16.mxu0 0
        %638 = vmatpush1.bf16.msra.mxu0 %v635
        %639 = vmatprep.subr.bf16.mxu0 0
        %640 = vmatpush1.bf16.msra.mxu0 0
        %641 = vmatprep.subr.bf16.mxu0 0
        %642 = vmatpush1.bf16.msra.mxu0 0
        %643 = vmatprep.subr.bf16.mxu0 0
        %644 = vmatpush1.bf16.msra.mxu0 0
        %645 = vmatprep.subr.bf16.mxu0 0
        %646 = vmatpush1.bf16.msra.mxu0 0
        %647 = vmatprep.subr.bf16.mxu0 0
        %648 = vmatpush1.bf16.msra.mxu0 0
        %649 = vmatprep.subr.bf16.mxu0 0
        %650 = vmatpush1.bf16.msra.mxu0 0
        %651 = vmatprep.subr.bf16.mxu0 0
        %652 = vmatpush1.bf16.msra.mxu0 0
        %653 = vmatprep.subr.bf16.mxu0 0
        %654 = vmatpush1.bf16.msra.mxu0 0
        %655 = vmatprep.subr.bf16.mxu0 0
        %656 = vmatpush1.bf16.msra.mxu0 0
        %657 = vmatprep.subr.bf16.mxu0 0
        %658 = vmatpush1.bf16.msra.mxu0 0
        %659 = vmatprep.subr.bf16.mxu0 0
        %660 = vmatpush1.bf16.msra.mxu0 0
        %661 = vmatprep.subr.bf16.mxu0 0
        %662 = vmatpush1.bf16.msra.mxu0 0
        %663 = vmatprep.subr.bf16.mxu0 0
        %664 = vmatpush1.bf16.msra.mxu0 0
        %665 = vmatprep.subr.bf16.mxu0 0
        %666 = vmatpush1.bf16.msra.mxu0 0
        %667 = vmatprep.subr.bf16.mxu0 0
        %668 = vmatpush1.bf16.msra.mxu0 0
        %669 = vmatprep.mubr.bf16.mxu0 0
        %670 = vmatmul.mubr.bf16.gmra.mrb[0].mxu0 %v631
        %v671 = vpop.f32.mrb[0].mxu0
        %v672 = vadd.f32 0.0, %v671
        %v673 = vpop.f32.mrb[0].mxu0
        %v674 = vpop.f32.mrb[0].mxu0
        %v675 = vpop.f32.mrb[0].mxu0
        %676 = vdwg.mxu0
        %v678 = vsel %vm517, %v629, 0
        %v681 = vsel %vm633, %v516, 0
        %683 = vmatprep.subr.bf16.mxu0 0
        %684 = vmatpush1.bf16.msra.mxu0 %v681
        %685 = vmatprep.subr.bf16.mxu0 0
        %686 = vmatpush1.bf16.msra.mxu0 0
        %687 = vmatprep.subr.bf16.mxu0 0
        %688 = vmatpush1.bf16.msra.mxu0 0
        %689 = vmatprep.subr.bf16.mxu0 0
        %690 = vmatpush1.bf16.msra.mxu0 0
        %691 = vmatprep.subr.bf16.mxu0 0
        %692 = vmatpush1.bf16.msra.mxu0 0
        %693 = vmatprep.subr.bf16.mxu0 0
        %694 = vmatpush1.bf16.msra.mxu0 0
        %695 = vmatprep.subr.bf16.mxu0 0
        %696 = vmatpush1.bf16.msra.mxu0 0
        %697 = vmatprep.subr.bf16.mxu0 0
        %698 = vmatpush1.bf16.msra.mxu0 0
        %699 = vmatprep.subr.bf16.mxu0 0
        %700 = vmatpush1.bf16.msra.mxu0 0
        %701 = vmatprep.subr.bf16.mxu0 0
        %702 = vmatpush1.bf16.msra.mxu0 0
        %703 = vmatprep.subr.bf16.mxu0 0
        %704 = vmatpush1.bf16.msra.mxu0 0
        %705 = vmatprep.subr.bf16.mxu0 0
        %706 = vmatpush1.bf16.msra.mxu0 0
        %707 = vmatprep.subr.bf16.mxu0 0
        %708 = vmatpush1.bf16.msra.mxu0 0
        %709 = vmatprep.subr.bf16.mxu0 0
        %710 = vmatpush1.bf16.msra.mxu0 0
        %711 = vmatprep.subr.bf16.mxu0 0
        %712 = vmatpush1.bf16.msra.mxu0 0
        %713 = vmatprep.subr.bf16.mxu0 0
        %714 = vmatpush1.bf16.msra.mxu0 0
        %715 = vmatprep.mubr.bf16.mxu0 0
        %716 = vmatmul.mubr.bf16.gmra.mrb[0].mxu0 %v678
        %v717 = vpop.f32.mrb[0].mxu0
        %v718 = vadd.f32 0.0, %v717
        %v719 = vpop.f32.mrb[0].mxu0
        %v720 = vpop.f32.mrb[0].mxu0
        %v721 = vpop.f32.mrb[0].mxu0
        %722 = vdwg.mxu0
        %v723 = vpack.c.bf16 %v718, %v672
        %v724 = vld [vmem:[%s375] sm:$0xf]
        %v726 = vsel %vm517, %v723, 0
        %v729 = vsel %vm633, %v724, 0
        %731 = vmatprep.subr.bf16.mxu0 0
        %732 = vmatpush1.bf16.msra.mxu0 %v729
        %733 = vmatprep.subr.bf16.mxu0 0
        %734 = vmatpush1.bf16.msra.mxu0 0
        %735 = vmatprep.subr.bf16.mxu0 0
        %736 = vmatpush1.bf16.msra.mxu0 0
        %737 = vmatprep.subr.bf16.mxu0 0
        %738 = vmatpush1.bf16.msra.mxu0 0
        %739 = vmatprep.subr.bf16.mxu0 0
        %740 = vmatpush1.bf16.msra.mxu0 0
        %741 = vmatprep.subr.bf16.mxu0 0
        %742 = vmatpush1.bf16.msra.mxu0 0
        %743 = vmatprep.subr.bf16.mxu0 0
        %744 = vmatpush1.bf16.msra.mxu0 0
        %745 = vmatprep.subr.bf16.mxu0 0
        %746 = vmatpush1.bf16.msra.mxu0 0
        %747 = vmatprep.subr.bf16.mxu0 0
        %748 = vmatpush1.bf16.msra.mxu0 0
        %749 = vmatprep.subr.bf16.mxu0 0
        %750 = vmatpush1.bf16.msra.mxu0 0
        %751 = vmatprep.subr.bf16.mxu0 0
        %752 = vmatpush1.bf16.msra.mxu0 0
        %753 = vmatprep.subr.bf16.mxu0 0
        %754 = vmatpush1.bf16.msra.mxu0 0
        %755 = vmatprep.subr.bf16.mxu0 0
        %756 = vmatpush1.bf16.msra.mxu0 0
        %757 = vmatprep.subr.bf16.mxu0 0
        %758 = vmatpush1.bf16.msra.mxu0 0
        %759 = vmatprep.subr.bf16.mxu0 0
        %760 = vmatpush1.bf16.msra.mxu0 0
        %761 = vmatprep.subr.bf16.mxu0 0
        %762 = vmatpush1.bf16.msra.mxu0 0
        %763 = vmatprep.mubr.bf16.mxu0 0
        %764 = vmatmul.mubr.bf16.gmra.mrb[0].mxu0 %v726
        %v765 = vpop.f32.mrb[0].mxu0
        %v766 = vadd.f32 0.0, %v765
        %v767 = vpop.f32.mrb[0].mxu0
        %v768 = vpop.f32.mrb[0].mxu0
        %v769 = vadd.f32 0.0, %v768
        %v770 = vpop.f32.mrb[0].mxu0
        %771 = vdwg.mxu0
        %p772 = scmp.eq.s32.totalorder %s26, 0
        // Predicated region
        $region49: #{tpu_custom_call.1} parent=47 // pred_check
          %p773 = pneg %p772
        $region50: #{tpu_custom_call.1} parent=47 // pred_check_branch
          %775 = sbr.rel (%p773) target = $region52
        $region51: #{tpu_custom_call.1} parent=47 // pred_region
          %v776 = vld [vmem:[%s6] sm:$0x1]
          %v778 = vlaneseq
          %v779 = vshrl.u32 %v778, 7
          %v780 = vsub.s32 0, %v779
          %v781 = vrot.slane %v776, %v780
          %783 = vst.msk [vmem:[%s349] sm:$0xff] %vm404, %v781
          %784 = vst.msk [vmem:[%s349 + $0x8] sm:$0xff] %vm404, %v781
        $region52: #{tpu_custom_call.1} parent=47 // pred_fallthru
          _
        %v785 = vld [vmem:[%s349] sm:$0xff]
        %v786 = vld [vmem:[%s349 + $0x8] sm:$0xff]
        %v787 = vadd.f32 %v785, %v766
        %v788 = vadd.f32 %v786, %v769
        %789 = vst.msk [vmem:[%s349] sm:$0xff] %vm404, %v787
        %790 = vst.msk [vmem:[%s349 + $0x8] sm:$0xff] %vm404, %v788
        %s791 = sand.u32 %s218, 1
        %s792 = scalar_lea.sflag [#allocation3], %s791
        %s793 = sand.u32 %s218, 1
        %s794 = smul.addr %s793, 16
        %s795 = scalar_lea.vmem [#allocation2], %s794
        // Predicated region
        $region53: #{tpu_custom_call.1} parent=47 // pred_check
          %p796 = pneg %p228
        $region54: #{tpu_custom_call.1} parent=47 // pred_check_branch
          %798 = sbr.rel (%p796) target = $region56
        $region55: #{tpu_custom_call.1} parent=47 // pred_region
          %s799 = smul.u32 2, %s25
          %s801 = ssub.s32 256, 256
          %802 = vsyncadd %s792, %s801
          %s803 = smul.addr %s799, 128
          %s804 = scalar_lea.hbm %s7, %s803
          %s805 = sshll.u32 %s795, 4
          %s806 = int_to_ptr.vmem [resolvable:$true] %s805
          %811 = dma.vmem_to_hbm [thread:$0]  %s806, 256, %s804, %s792, 128, 128, 8
        $region56: #{tpu_custom_call.1} parent=47 // pred_fallthru
          _
      $region48: #{tpu_custom_call.1} parent=5 // pred_fallthru
        _
      %p812 = scmp.le.s32.totalorder 2, %s16
      // Predicated region
      $region57: #{tpu_custom_call.1} parent=5 // pred_check
        %p813 = pneg %p812
      $region58: #{tpu_custom_call.1} parent=5 // pred_check_branch
        %815 = sbr.rel (%p813) target = $region60
      $region59: #{tpu_custom_call.1} parent=5 // pred_region
        %s816 = ssub.s32 %s16, 2
        // Predicated region
        $region61: #{tpu_custom_call.1} parent=59 // pred_check
          %p817 = pneg %p234
        $region62: #{tpu_custom_call.1} parent=59 // pred_check_branch
          %819 = sbr.rel (%p817) target = $region64
        $region63: #{tpu_custom_call.1} parent=59 // pred_region
          %s820 = sand.u32 %s219, 1
          %s821 = scalar_lea.sflag [#allocation3], %s820
          %s822 = sand.u32 %s219, 1
          %s823 = smul.addr %s822, 16
          %s824 = scalar_lea.vmem [#allocation2], %s823
          %825 = dma.done %s821, 256
        $region64: #{tpu_custom_call.1} parent=59 // pred_fallthru
          _
      $region60: #{tpu_custom_call.1} parent=5 // pred_fallthru
        _
    $region6: #{tpu_custom_call.1} parent=1 // loop_footer
      %s20 = sadd.s32 1, %s16
    $region7: #{tpu_custom_call.1} parent=1 // loop_footer_branch
      %15 = sbr.rel target = $region3
    $region8: #{tpu_custom_call.1} parent=1 // loop_exit
      _
    %826 = vsyncpa [#allocation3], 1
    %s827 = scalar_lea.sflag [#allocation3], 1
    %828 = vsyncpa %s827, 1

</llo_original>
